<compile_context>
chip_gen: v5e
topology: v5e:2x2
jax: 0.10.0
libtpu: 0.0.40
codegen_flags: <defaults>
</compile_context>

<pallas_src>
import functools

import jax
import jax.numpy as jnp
from jax.experimental import pallas as pl
from jax.experimental.pallas import tpu as pltpu

_BN_EPS = 1e-5  # torch.nn.BatchNorm2d default eps


def _round_up(v, mult):
    return ((v + mult - 1) // mult) * mult


def _pose_fused_kernel(p_ref, wk_ref, wbig_ref, seg_ref, bl_ref, o_ref, *,
                       m_valid, n_out):
    # p_ref   : [Mp, Kp]          zero-padded im2col patches, rows ordered (n, ho, wo)
    # wk_ref  : [Kp, 128]         zero-padded im2col conv weight
    # wbig_ref: [n_out, Mp, 128]  Linear weight with the view(N,-1,128) scramble
    #                             pre-applied per patch row
    # seg_ref : [N, Mp]           segment-mean matrix (1/HW on own-sample rows, else 0)
    # bl_ref  : [1, n_out]        Linear bias
    # o_ref   : [N, n_out]

    # --- Conv2d(2C->128, k=3, s=2) as a single MXU matmul over im2col patches ---
    z = jnp.dot(p_ref[...], wk_ref[...], preferred_element_type=jnp.float32)   # [Mp,128]
    # Conv bias intentionally omitted: training-mode BatchNorm subtracts the
    # per-channel mean, so a per-channel constant cancels exactly.

    # --- BatchNorm2d (training-mode batch stats, affine = identity), one pass ---
    # Padded rows of z are exactly zero, so they add nothing to sum / sum-of-squares;
    # divide by the true row count m_valid.
    inv_m = 1.0 / m_valid
    mu = jnp.sum(z, axis=0, keepdims=True) * inv_m                              # [1,128]
    var = jnp.sum(z * z, axis=0, keepdims=True) * inv_m - mu * mu               # [1,128]
    h = jnp.maximum((z - mu) * jax.lax.rsqrt(var + _BN_EPS), 0.0)               # BN + ReLU

    # --- view(N,-1,128) + Linear(128->6) + mean(dim=1), folded:
    #       out[n, d] = sum_{m,c} seg[n, m] * h[m, c] * wbig[d, m, c] + bl[d]
    seg = seg_ref[...]                                                          # [N, Mp]
    lane = jax.lax.broadcasted_iota(jnp.int32, (1, n_out), 1)                   # [1, n_out]
    acc = jnp.zeros((seg.shape[0], n_out), jnp.float32)
    for d in range(n_out):  # static unroll, n_out == 6; all ops are lane-dense
        u = jnp.dot(seg, h * wbig_ref[d], preferred_element_type=jnp.float32)   # [N,128]
        col = jnp.sum(u, axis=1, keepdims=True)                                 # [N,1]
        acc = acc + col * (lane == d).astype(jnp.float32)                       # place column d
    o_ref[...] = acc + bl_ref[...]


def init_params(key, c_in):
    # Deterministic synthetic parameters (the PyTorch module creates fresh
    # randomly-initialized layers inside forward()).
    k1, k2, k3, k4 = jax.random.split(key, 4)
    fan_in_c = 2 * c_in * 9
    conv_w = jax.random.normal(k1, (128, 2 * c_in, 3, 3), jnp.float32) / jnp.sqrt(fan_in_c)
    conv_b = jax.random.normal(k2, (128,), jnp.float32) * 0.01  # unused: cancelled by BN
    lin_w = jax.random.normal(k3, (6, 128), jnp.float32) / jnp.sqrt(128.0)
    lin_b = jax.random.normal(k4, (6,), jnp.float32) * 0.01
    return dict(conv_w=conv_w, conv_b=conv_b, lin_w=lin_w, lin_b=lin_b)


def pose_layer(encodingQ, encodingP, params):
    n, c, h, w = encodingQ.shape
    kh = kw = 3
    stride = 2
    ho = (h - kh) // stride + 1
    wo = (w - kw) // stride + 1
    hw = ho * wo
    m = n * hw                      # valid patch rows (= N*Ho*Wo)
    k = 2 * c * kh * kw             # im2col columns (= 2C*9)
    m_pad = _round_up(m, 8)         # sublane alignment
    k_pad = _round_up(k, 128)       # lane alignment

    # --- patch extraction: one XLA op (replaces the 9-slice/stack/5D-transpose chain) ---
    # TODO(synk): patch extraction stays as plain-JAX glue; an in-kernel gather is
    # not worthwhile at this size (C=8 would be very lane-sparse).
    x = jnp.concatenate([encodingQ, encodingP], axis=1).transpose(0, 2, 3, 1)   # NHWC
    patches = jax.lax.conv_general_dilated_patches(
        x, (kh, kw), (stride, stride), "VALID",
        dimension_numbers=("NHWC", "HWIO", "NHWC"))                             # [N,Ho,Wo,K]
    patches = patches.reshape(m, k)
    patches = jnp.pad(patches, ((0, m_pad - m), (0, k_pad - k)))                # [Mp,Kp]

    # --- conv weight -> im2col layout via the SAME patch op (ordering-proof) ---
    cw = params["conv_w"].transpose(0, 2, 3, 1)                                 # [128,3,3,2C]
    wk = jax.lax.conv_general_dilated_patches(
        cw, (kh, kw), (1, 1), "VALID",
        dimension_numbers=("NHWC", "HWIO", "NHWC")).reshape(128, k).T           # [K,128]
    wk = jnp.pad(wk, ((0, k_pad - k), (0, 0)))                                  # [Kp,128]
    # params["conv_b"] is not used: exactly cancelled by training-mode BatchNorm.

    # --- fold view(N,-1,128)+Linear+mean: per-row gathered weights + segment mean ---
    # Conv output element (row m, channel ch) sits at flat NCHW offset ch*hw + (m % hw)
    # inside its sample, i.e. column (ch*hw + m%hw) % 128 of the viewed [hw,128]
    # matrix, so it multiplies Linear-weight row (ch*hw + m%hw) % 128.
    lin_w = params["lin_w"]                                                     # [6,128]
    ch_idx = jnp.arange(128)
    sp_idx = jnp.arange(m_pad) % hw
    wbig = lin_w[:, (ch_idx[None, :] * hw + sp_idx[:, None]) % 128]             # [6,Mp,128]
    seg = ((jnp.arange(m_pad)[None, :] // hw) == jnp.arange(n)[:, None])
    seg = seg.astype(jnp.float32) / float(hw)                                   # [N,Mp]
    bl = params["lin_b"].reshape(1, 6)

    flops = (2 * m_pad * k_pad * 128                      # conv matmul
             + 8 * m_pad * 128                            # BN + ReLU passes
             + 6 * (m_pad * 128 + 2 * n * m_pad * 128))   # folded linear+mean tail
    bytes_accessed = 4 * (m_pad * k_pad + k_pad * 128 + 6 * m_pad * 128
                          + n * m_pad + 6 + n * 6)

    vmem = pl.BlockSpec(memory_space=pltpu.MemorySpace.VMEM)
    return pl.pallas_call(
        functools.partial(_pose_fused_kernel, m_valid=float(m), n_out=6),
        out_shape=jax.ShapeDtypeStruct((n, 6), jnp.float32),
        in_specs=[vmem, vmem, vmem, vmem, vmem],
        out_specs=vmem,
        compiler_params=pltpu.CompilerParams(vmem_limit_bytes=32 * 1024 * 1024),
        cost_estimate=pl.CostEstimate(flops=flops, transcendentals=128,
                                      bytes_accessed=bytes_accessed),
    )(patches, wk, wbig, seg, bl)


if __name__ == "__main__":
    key = jax.random.PRNGKey(0)
    kq, kp, kparam = jax.random.split(key, 3)
    N, C, H, W = 2, 4, 16, 16
    encodingQ = jax.random.normal(kq, (N, C, H, W), jnp.float32)
    encodingP = jax.random.normal(kp, (N, C, H, W), jnp.float32)
    params = init_params(kparam, C)

    out = jax.jit(pose_layer)(encodingQ, encodingP, params)
    out = jax.block_until_ready(out)
    assert out.shape == (N, 6) and out.dtype == jnp.float32
    assert bool(jnp.all(jnp.isfinite(out)))
    print("KERNEL_OK")
</pallas_src>

<mosaic_0001>
module attributes {stable_mosaic.version = 11 : i64} {
  func.func @_pose_fused_kernel(%arg0: memref<104x128xf32, #tpu.memory_space<vmem>>, %arg1: memref<128x128xf32, #tpu.memory_space<vmem>>, %arg2: memref<6x104x128xf32, #tpu.memory_space<vmem>>, %arg3: memref<2x104xf32, #tpu.memory_space<vmem>>, %arg4: memref<1x6xf32, #tpu.memory_space<vmem>>, %arg5: memref<2x6xf32, #tpu.memory_space<vmem>>) attributes {dimension_semantics = [], scalar_prefetch = 0 : i64, scratch_operands = 0 : i64, tpu.core_type = #tpu.core_type<tc>} {
    %c0 = arith.constant 0 : index
    %c0_0 = arith.constant 0 : index
    %0 = vector.load %arg0[%c0, %c0_0] : memref<104x128xf32, #tpu.memory_space<vmem>>, vector<104x128xf32>
    %c0_1 = arith.constant 0 : index
    %c0_2 = arith.constant 0 : index
    %1 = vector.load %arg1[%c0_1, %c0_2] : memref<128x128xf32, #tpu.memory_space<vmem>>, vector<128x128xf32>
    %cst = arith.constant dense<0.000000e+00> : vector<104x128xf32>
    %2 = tpu.matmul %0, %1, %cst {dimension_numbers = #tpu.dot_dimension_numbers<[1], [0], [0], [1], [0, 0, 1, 1], [], []>} : vector<104x128xf32>, vector<128x128xf32>, vector<104x128xf32> -> vector<104x128xf32>
    %cst_3 = arith.constant dense<0.000000e+00> : vector<128xf32>
    %3 = vector.multi_reduction <add>, %2, %cst_3 [0] : vector<104x128xf32> to vector<128xf32>
    %4 = vector.shape_cast %3 : vector<128xf32> to vector<1x128xf32>
    %cst_4 = arith.constant 0.0102040814 : f32
    %5 = vector.broadcast %cst_4 : f32 to vector<1x128xf32>
    %6 = arith.mulf %4, %5 : vector<1x128xf32>
    %7 = arith.mulf %2, %2 : vector<104x128xf32>
    %cst_5 = arith.constant dense<0.000000e+00> : vector<128xf32>
    %8 = vector.multi_reduction <add>, %7, %cst_5 [0] : vector<104x128xf32> to vector<128xf32>
    %9 = vector.shape_cast %8 : vector<128xf32> to vector<1x128xf32>
    %cst_6 = arith.constant 0.0102040814 : f32
    %10 = vector.broadcast %cst_6 : f32 to vector<1x128xf32>
    %11 = arith.mulf %9, %10 : vector<1x128xf32>
    %12 = arith.mulf %6, %6 : vector<1x128xf32>
    %13 = arith.subf %11, %12 : vector<1x128xf32>
    %14 = vector.broadcast %6 : vector<1x128xf32> to vector<104x128xf32>
    %15 = arith.subf %2, %14 : vector<104x128xf32>
    %cst_7 = arith.constant 9.99999974E-6 : f32
    %16 = vector.broadcast %cst_7 : f32 to vector<1x128xf32>
    %17 = arith.addf %13, %16 : vector<1x128xf32>
    %18 = math.rsqrt %17 : vector<1x128xf32>
    %19 = vector.broadcast %18 : vector<1x128xf32> to vector<104x128xf32>
    %20 = arith.mulf %15, %19 : vector<104x128xf32>
    %cst_8 = arith.constant 0.000000e+00 : f32
    %21 = vector.broadcast %cst_8 : f32 to vector<104x128xf32>
    %22 = arith.maximumf %20, %21 : vector<104x128xf32>
    %c0_9 = arith.constant 0 : index
    %c0_10 = arith.constant 0 : index
    %23 = vector.load %arg3[%c0_9, %c0_10] : memref<2x104xf32, #tpu.memory_space<vmem>>, vector<2x104xf32>
    %24 = tpu.iota {dimensions = array<i32: 1>} : vector<1x6xi32>
    %cst_11 = arith.constant 0.000000e+00 : f32
    %25 = vector.broadcast %cst_11 : f32 to vector<2x6xf32>
    %c0_12 = arith.constant 0 : index
    %c0_13 = arith.constant 0 : index
    %c0_14 = arith.constant 0 : index
    %26 = vector.load %arg2[%c0_12, %c0_13, %c0_14] : memref<6x104x128xf32, #tpu.memory_space<vmem>>, vector<1x104x128xf32>
    %27 = vector.shape_cast %26 : vector<1x104x128xf32> to vector<104x128xf32>
    %28 = arith.mulf %22, %27 : vector<104x128xf32>
    %cst_15 = arith.constant dense<0.000000e+00> : vector<2x128xf32>
    %29 = tpu.matmul %23, %28, %cst_15 {dimension_numbers = #tpu.dot_dimension_numbers<[1], [0], [0], [1], [0, 0, 1, 1], [], []>} : vector<2x104xf32>, vector<104x128xf32>, vector<2x128xf32> -> vector<2x128xf32>
    %cst_16 = arith.constant dense<0.000000e+00> : vector<2xf32>
    %30 = vector.multi_reduction <add>, %29, %cst_16 [1] : vector<2x128xf32> to vector<2xf32>
    %31 = vector.shape_cast %30 : vector<2xf32> to vector<2x1xf32>
    %c0_i32 = arith.constant 0 : i32
    %32 = vector.broadcast %c0_i32 : i32 to vector<1x6xi32>
    %33 = arith.cmpi eq, %24, %32 : vector<1x6xi32>
    %34 = arith.extui %33 : vector<1x6xi1> to vector<1x6xi32>
    %35 = arith.sitofp %34 : vector<1x6xi32> to vector<1x6xf32>
    %36 = vector.broadcast %31 : vector<2x1xf32> to vector<2x6xf32>
    %37 = vector.broadcast %35 : vector<1x6xf32> to vector<2x6xf32>
    %38 = arith.mulf %36, %37 : vector<2x6xf32>
    %39 = arith.addf %25, %38 : vector<2x6xf32>
    %c1 = arith.constant 1 : index
    %c0_17 = arith.constant 0 : index
    %c0_18 = arith.constant 0 : index
    %40 = vector.load %arg2[%c1, %c0_17, %c0_18] : memref<6x104x128xf32, #tpu.memory_space<vmem>>, vector<1x104x128xf32>
    %41 = vector.shape_cast %40 : vector<1x104x128xf32> to vector<104x128xf32>
    %42 = arith.mulf %22, %41 : vector<104x128xf32>
    %cst_19 = arith.constant dense<0.000000e+00> : vector<2x128xf32>
    %43 = tpu.matmul %23, %42, %cst_19 {dimension_numbers = #tpu.dot_dimension_numbers<[1], [0], [0], [1], [0, 0, 1, 1], [], []>} : vector<2x104xf32>, vector<104x128xf32>, vector<2x128xf32> -> vector<2x128xf32>
    %cst_20 = arith.constant dense<0.000000e+00> : vector<2xf32>
    %44 = vector.multi_reduction <add>, %43, %cst_20 [1] : vector<2x128xf32> to vector<2xf32>
    %45 = vector.shape_cast %44 : vector<2xf32> to vector<2x1xf32>
    %c1_i32 = arith.constant 1 : i32
    %46 = vector.broadcast %c1_i32 : i32 to vector<1x6xi32>
    %47 = arith.cmpi eq, %24, %46 : vector<1x6xi32>
    %48 = arith.extui %47 : vector<1x6xi1> to vector<1x6xi32>
    %49 = arith.sitofp %48 : vector<1x6xi32> to vector<1x6xf32>
    %50 = vector.broadcast %45 : vector<2x1xf32> to vector<2x6xf32>
    %51 = vector.broadcast %49 : vector<1x6xf32> to vector<2x6xf32>
    %52 = arith.mulf %50, %51 : vector<2x6xf32>
    %53 = arith.addf %39, %52 : vector<2x6xf32>
    %c2 = arith.constant 2 : index
    %c0_21 = arith.constant 0 : index
    %c0_22 = arith.constant 0 : index
    %54 = vector.load %arg2[%c2, %c0_21, %c0_22] : memref<6x104x128xf32, #tpu.memory_space<vmem>>, vector<1x104x128xf32>
    %55 = vector.shape_cast %54 : vector<1x104x128xf32> to vector<104x128xf32>
    %56 = arith.mulf %22, %55 : vector<104x128xf32>
    %cst_23 = arith.constant dense<0.000000e+00> : vector<2x128xf32>
    %57 = tpu.matmul %23, %56, %cst_23 {dimension_numbers = #tpu.dot_dimension_numbers<[1], [0], [0], [1], [0, 0, 1, 1], [], []>} : vector<2x104xf32>, vector<104x128xf32>, vector<2x128xf32> -> vector<2x128xf32>
    %cst_24 = arith.constant dense<0.000000e+00> : vector<2xf32>
    %58 = vector.multi_reduction <add>, %57, %cst_24 [1] : vector<2x128xf32> to vector<2xf32>
    %59 = vector.shape_cast %58 : vector<2xf32> to vector<2x1xf32>
    %c2_i32 = arith.constant 2 : i32
    %60 = vector.broadcast %c2_i32 : i32 to vector<1x6xi32>
    %61 = arith.cmpi eq, %24, %60 : vector<1x6xi32>
    %62 = arith.extui %61 : vector<1x6xi1> to vector<1x6xi32>
    %63 = arith.sitofp %62 : vector<1x6xi32> to vector<1x6xf32>
    %64 = vector.broadcast %59 : vector<2x1xf32> to vector<2x6xf32>
    %65 = vector.broadcast %63 : vector<1x6xf32> to vector<2x6xf32>
    %66 = arith.mulf %64, %65 : vector<2x6xf32>
    %67 = arith.addf %53, %66 : vector<2x6xf32>
    %c3 = arith.constant 3 : index
    %c0_25 = arith.constant 0 : index
    %c0_26 = arith.constant 0 : index
    %68 = vector.load %arg2[%c3, %c0_25, %c0_26] : memref<6x104x128xf32, #tpu.memory_space<vmem>>, vector<1x104x128xf32>
    %69 = vector.shape_cast %68 : vector<1x104x128xf32> to vector<104x128xf32>
    %70 = arith.mulf %22, %69 : vector<104x128xf32>
    %cst_27 = arith.constant dense<0.000000e+00> : vector<2x128xf32>
    %71 = tpu.matmul %23, %70, %cst_27 {dimension_numbers = #tpu.dot_dimension_numbers<[1], [0], [0], [1], [0, 0, 1, 1], [], []>} : vector<2x104xf32>, vector<104x128xf32>, vector<2x128xf32> -> vector<2x128xf32>
    %cst_28 = arith.constant dense<0.000000e+00> : vector<2xf32>
    %72 = vector.multi_reduction <add>, %71, %cst_28 [1] : vector<2x128xf32> to vector<2xf32>
    %73 = vector.shape_cast %72 : vector<2xf32> to vector<2x1xf32>
    %c3_i32 = arith.constant 3 : i32
    %74 = vector.broadcast %c3_i32 : i32 to vector<1x6xi32>
    %75 = arith.cmpi eq, %24, %74 : vector<1x6xi32>
    %76 = arith.extui %75 : vector<1x6xi1> to vector<1x6xi32>
    %77 = arith.sitofp %76 : vector<1x6xi32> to vector<1x6xf32>
    %78 = vector.broadcast %73 : vector<2x1xf32> to vector<2x6xf32>
    %79 = vector.broadcast %77 : vector<1x6xf32> to vector<2x6xf32>
    %80 = arith.mulf %78, %79 : vector<2x6xf32>
    %81 = arith.addf %67, %80 : vector<2x6xf32>
    %c4 = arith.constant 4 : index
    %c0_29 = arith.constant 0 : index
    %c0_30 = arith.constant 0 : index
    %82 = vector.load %arg2[%c4, %c0_29, %c0_30] : memref<6x104x128xf32, #tpu.memory_space<vmem>>, vector<1x104x128xf32>
    %83 = vector.shape_cast %82 : vector<1x104x128xf32> to vector<104x128xf32>
    %84 = arith.mulf %22, %83 : vector<104x128xf32>
    %cst_31 = arith.constant dense<0.000000e+00> : vector<2x128xf32>
    %85 = tpu.matmul %23, %84, %cst_31 {dimension_numbers = #tpu.dot_dimension_numbers<[1], [0], [0], [1], [0, 0, 1, 1], [], []>} : vector<2x104xf32>, vector<104x128xf32>, vector<2x128xf32> -> vector<2x128xf32>
    %cst_32 = arith.constant dense<0.000000e+00> : vector<2xf32>
    %86 = vector.multi_reduction <add>, %85, %cst_32 [1] : vector<2x128xf32> to vector<2xf32>
    %87 = vector.shape_cast %86 : vector<2xf32> to vector<2x1xf32>
    %c4_i32 = arith.constant 4 : i32
    %88 = vector.broadcast %c4_i32 : i32 to vector<1x6xi32>
    %89 = arith.cmpi eq, %24, %88 : vector<1x6xi32>
    %90 = arith.extui %89 : vector<1x6xi1> to vector<1x6xi32>
    %91 = arith.sitofp %90 : vector<1x6xi32> to vector<1x6xf32>
    %92 = vector.broadcast %87 : vector<2x1xf32> to vector<2x6xf32>
    %93 = vector.broadcast %91 : vector<1x6xf32> to vector<2x6xf32>
    %94 = arith.mulf %92, %93 : vector<2x6xf32>
    %95 = arith.addf %81, %94 : vector<2x6xf32>
    %c5 = arith.constant 5 : index
    %c0_33 = arith.constant 0 : index
    %c0_34 = arith.constant 0 : index
    %96 = vector.load %arg2[%c5, %c0_33, %c0_34] : memref<6x104x128xf32, #tpu.memory_space<vmem>>, vector<1x104x128xf32>
    %97 = vector.shape_cast %96 : vector<1x104x128xf32> to vector<104x128xf32>
    %98 = arith.mulf %22, %97 : vector<104x128xf32>
    %cst_35 = arith.constant dense<0.000000e+00> : vector<2x128xf32>
    %99 = tpu.matmul %23, %98, %cst_35 {dimension_numbers = #tpu.dot_dimension_numbers<[1], [0], [0], [1], [0, 0, 1, 1], [], []>} : vector<2x104xf32>, vector<104x128xf32>, vector<2x128xf32> -> vector<2x128xf32>
    %cst_36 = arith.constant dense<0.000000e+00> : vector<2xf32>
    %100 = vector.multi_reduction <add>, %99, %cst_36 [1] : vector<2x128xf32> to vector<2xf32>
    %101 = vector.shape_cast %100 : vector<2xf32> to vector<2x1xf32>
    %c5_i32 = arith.constant 5 : i32
    %102 = vector.broadcast %c5_i32 : i32 to vector<1x6xi32>
    %103 = arith.cmpi eq, %24, %102 : vector<1x6xi32>
    %104 = arith.extui %103 : vector<1x6xi1> to vector<1x6xi32>
    %105 = arith.sitofp %104 : vector<1x6xi32> to vector<1x6xf32>
    %106 = vector.broadcast %101 : vector<2x1xf32> to vector<2x6xf32>
    %107 = vector.broadcast %105 : vector<1x6xf32> to vector<2x6xf32>
    %108 = arith.mulf %106, %107 : vector<2x6xf32>
    %109 = arith.addf %95, %108 : vector<2x6xf32>
    %c0_37 = arith.constant 0 : index
    %c0_38 = arith.constant 0 : index
    %110 = vector.load %arg4[%c0_37, %c0_38] : memref<1x6xf32, #tpu.memory_space<vmem>>, vector<1x6xf32>
    %111 = vector.broadcast %110 : vector<1x6xf32> to vector<2x6xf32>
    %112 = arith.addf %109, %111 : vector<2x6xf32>
    %c0_39 = arith.constant 0 : index
    %c0_40 = arith.constant 0 : index
    %113 = vector.load %arg5[%c0_39, %c0_40] : memref<2x6xf32, #tpu.memory_space<vmem>>, vector<2x6xf32>
    tpu.vector_store %arg5[%c0_39, %c0_40], %112 {strides = array<i32>} : memref<2x6xf32, #tpu.memory_space<vmem>>, vector<2x6xf32>,
    return
  }
}

</mosaic_0001>

<llo_original>
// kernel: pose_layer.1
$region0: #{pose_layer.1}
  #allocation0 [shape = 'u32[]', space=smem, size = 0x4, offset = 0x4, fixed_abs, tag = 'smem constant byte address 0x4 - core index']
  #allocation1 [shape = 'u32[72,128]{1,0:T(1,128)}', space=vmem, size = 0x9000, scoped, tag = 'internal scratch']
  %s0 = inlined_call_operand.vmem [shape: f32[104,128], index: 0, kind: input, shape index: {}]
  %s1 = inlined_call_operand.vmem [shape: f32[128,128], index: 1, kind: input, shape index: {}]
  %s2 = inlined_call_operand.vmem [shape: f32[6,104,128], index: 2, kind: input, shape index: {}]
  %s3 = inlined_call_operand.vmem [shape: f32[2,104], index: 3, kind: input, shape index: {}]
  %s4 = inlined_call_operand.vmem [shape: f32[1,6], index: 4, kind: input, shape index: {}]
  %s5 = inlined_call_operand.hbm [shape: f32[2,6], index: 5, kind: output, shape index: {}]
  %s6 = sld [smem:[#allocation0]]
  $region30: #{pose_layer.1} parent=0
    _
  %s8 = ssub.s32 1, %s6
  %s9 = scalar_select 0, %s8, %s6
  $region1: #{pose_layer.1} parent=0
    #allocation2 [shape = 'u8[1024]{0}', space=vmem, size = 0x400, scoped, tag = 'output window, operand 0, single buffered']
    #allocation3 [shape = 's32[1]{0}', space=sflag, size = 0x4, scoped, tag = 'scoped memory for pose_layer.1']
    %10 = vsyncpa [#allocation3], 0
    // Predicated region
    $region2: #{pose_layer.1} parent=1 // pred_check
      _
    $region3: #{pose_layer.1} parent=1 // pred_check_branch
      %12 = sbr.rel (0) target = $region5
    $region4: #{pose_layer.1} parent=1 // pred_region
      _
    $region5: #{pose_layer.1} parent=1 // pred_fallthru
      _
    // Predicated region
    $region6: #{pose_layer.1} parent=1 // pred_check
      _
    $region7: #{pose_layer.1} parent=1 // pred_check_branch
      %14 = sbr.rel (0) target = $region9
    $region8: #{pose_layer.1} parent=1 // pred_region
      _
    $region9: #{pose_layer.1} parent=1 // pred_fallthru
      _
    // Predicated region
    $region10: #{pose_layer.1} parent=1 // pred_check
      _
    $region11: #{pose_layer.1} parent=1 // pred_check_branch
      %16 = sbr.rel (0) target = $region13
    $region12: #{pose_layer.1} parent=1 // pred_region
      _
    $region13: #{pose_layer.1} parent=1 // pred_fallthru
      _
    // Predicated region
    $region14: #{pose_layer.1} parent=1 // pred_check
      _
    $region15: #{pose_layer.1} parent=1 // pred_check_branch
      %18 = sbr.rel (0) target = $region17
    $region16: #{pose_layer.1} parent=1 // pred_region
      _
    $region17: #{pose_layer.1} parent=1 // pred_fallthru
      _
    // Predicated region
    $region18: #{pose_layer.1} parent=1 // pred_check
      _
    $region19: #{pose_layer.1} parent=1 // pred_check_branch
      %20 = sbr.rel (0) target = $region21
    $region20: #{pose_layer.1} parent=1 // pred_region
      _
    $region21: #{pose_layer.1} parent=1 // pred_fallthru
      _
    %v21 = vld [vmem:[%s0] sm:$0xff]
    %v22 = vld [vmem:[%s0 + $0x8] sm:$0xff]
    %v23 = vld [vmem:[%s0 + $0x10] sm:$0xff]
    %v24 = vld [vmem:[%s0 + $0x18] sm:$0xff]
    %v25 = vld [vmem:[%s0 + $0x20] sm:$0xff]
    %v26 = vld [vmem:[%s0 + $0x28] sm:$0xff]
    %v27 = vld [vmem:[%s0 + $0x30] sm:$0xff]
    %v28 = vld [vmem:[%s0 + $0x38] sm:$0xff]
    %v29 = vld [vmem:[%s0 + $0x40] sm:$0xff]
    %v30 = vld [vmem:[%s0 + $0x48] sm:$0xff]
    %v31 = vld [vmem:[%s0 + $0x50] sm:$0xff]
    %v32 = vld [vmem:[%s0 + $0x58] sm:$0xff]
    %v33 = vld [vmem:[%s0 + $0x60] sm:$0xff]
    %v34 = vld [vmem:[%s1] sm:$0xff]
    %v35 = vld [vmem:[%s1 + $0x8] sm:$0xff]
    %v36 = vld [vmem:[%s1 + $0x10] sm:$0xff]
    %v37 = vld [vmem:[%s1 + $0x18] sm:$0xff]
    %v38 = vld [vmem:[%s1 + $0x20] sm:$0xff]
    %v39 = vld [vmem:[%s1 + $0x28] sm:$0xff]
    %v40 = vld [vmem:[%s1 + $0x30] sm:$0xff]
    %v41 = vld [vmem:[%s1 + $0x38] sm:$0xff]
    %v42 = vld [vmem:[%s1 + $0x40] sm:$0xff]
    %v43 = vld [vmem:[%s1 + $0x48] sm:$0xff]
    %v44 = vld [vmem:[%s1 + $0x50] sm:$0xff]
    %v45 = vld [vmem:[%s1 + $0x58] sm:$0xff]
    %v46 = vld [vmem:[%s1 + $0x60] sm:$0xff]
    %v47 = vld [vmem:[%s1 + $0x68] sm:$0xff]
    %v48 = vld [vmem:[%s1 + $0x70] sm:$0xff]
    %v49 = vld [vmem:[%s1 + $0x78] sm:$0xff]
    %50 = vmatpush.msra.mxu0 %v49
    %51 = vmatpush.msra.mxu0 %v48
    %52 = vmatpush.msra.mxu0 %v47
    %53 = vmatpush.msra.mxu0 %v46
    %54 = vmatpush.msra.mxu0 %v45
    %55 = vmatpush.msra.mxu0 %v44
    %56 = vmatpush.msra.mxu0 %v43
    %57 = vmatpush.msra.mxu0 %v42
    %58 = vmatpush.msra.mxu0 %v41
    %59 = vmatpush.msra.mxu0 %v40
    %60 = vmatpush.msra.mxu0 %v39
    %61 = vmatpush.msra.mxu0 %v38
    %62 = vmatpush.msra.mxu0 %v37
    %63 = vmatpush.msra.mxu0 %v36
    %64 = vmatpush.msra.mxu0 %v35
    %65 = vmatpush.msra.mxu0 %v34
    %66 = vmatmul.f32.gmra.mxu0 %v21
    %v67 = vpop.f32.mrf.mxu0
    %v68 = vadd.f32 0.0, %v67
    %69 = vmatmul.f32.gmra.mxu0 %v22
    %v70 = vpop.f32.mrf.mxu0
    %v71 = vadd.f32 0.0, %v70
    %72 = vmatmul.f32.gmra.mxu0 %v23
    %v73 = vpop.f32.mrf.mxu0
    %v74 = vadd.f32 0.0, %v73
    %75 = vmatmul.f32.gmra.mxu0 %v24
    %v76 = vpop.f32.mrf.mxu0
    %v77 = vadd.f32 0.0, %v76
    %78 = vmatmul.f32.gmra.mxu0 %v25
    %v79 = vpop.f32.mrf.mxu0
    %v80 = vadd.f32 0.0, %v79
    %81 = vmatmul.f32.gmra.mxu0 %v26
    %v82 = vpop.f32.mrf.mxu0
    %v83 = vadd.f32 0.0, %v82
    %84 = vmatmul.f32.gmra.mxu0 %v27
    %v85 = vpop.f32.mrf.mxu0
    %v86 = vadd.f32 0.0, %v85
    %87 = vmatmul.f32.gmra.mxu0 %v28
    %v88 = vpop.f32.mrf.mxu0
    %v89 = vadd.f32 0.0, %v88
    %90 = vmatmul.f32.gmra.mxu0 %v29
    %v91 = vpop.f32.mrf.mxu0
    %v92 = vadd.f32 0.0, %v91
    %93 = vmatmul.f32.gmra.mxu0 %v30
    %v94 = vpop.f32.mrf.mxu0
    %v95 = vadd.f32 0.0, %v94
    %96 = vmatmul.f32.gmra.mxu0 %v31
    %v97 = vpop.f32.mrf.mxu0
    %v98 = vadd.f32 0.0, %v97
    %99 = vmatmul.f32.gmra.mxu0 %v32
    %v100 = vpop.f32.mrf.mxu0
    %v101 = vadd.f32 0.0, %v100
    %102 = vmatmul.f32.gmra.mxu0 %v33
    %v103 = vpop.f32.mrf.mxu0
    %v104 = vadd.f32 0.0, %v103
    %105 = vdwg.mxu0
    %v106 = vadd.f32 %v68, %v71
    %v107 = vadd.f32 %v106, %v74
    %v108 = vadd.f32 %v107, %v77
    %v109 = vadd.f32 %v108, %v80
    %v110 = vadd.f32 %v109, %v83
    %v111 = vadd.f32 %v110, %v86
    %v112 = vadd.f32 %v111, %v89
    %v113 = vadd.f32 %v112, %v92
    %v114 = vadd.f32 %v113, %v95
    %v115 = vadd.f32 %v114, %v98
    %v116 = vadd.f32 %v115, %v101
    %v117 = vadd.f32 %v116, %v104
    %v118 = vrot.slane %v117, 4
    %v119 = vadd.f32 %v117, %v118
    %v120 = vrot.slane %v119, 2
    %v121 = vadd.f32 %v119, %v120
    %v122 = vrot.slane %v121, 1
    %v123 = vadd.f32 %v121, %v122
    %v124 = vmul.f32 %v123, 0.010204081
    %v125 = vmul.f32 %v68, %v68
    %v126 = vmul.f32 %v71, %v71
    %v127 = vmul.f32 %v74, %v74
    %v128 = vmul.f32 %v77, %v77
    %v129 = vmul.f32 %v80, %v80
    %v130 = vmul.f32 %v83, %v83
    %v131 = vmul.f32 %v86, %v86
    %v132 = vmul.f32 %v89, %v89
    %v133 = vmul.f32 %v92, %v92
    %v134 = vmul.f32 %v95, %v95
    %v135 = vmul.f32 %v98, %v98
    %v136 = vmul.f32 %v101, %v101
    %v137 = vmul.f32 %v104, %v104
    %v138 = vadd.f32 %v125, %v126
    %v139 = vadd.f32 %v138, %v127
    %v140 = vadd.f32 %v139, %v128
    %v141 = vadd.f32 %v140, %v129
    %v142 = vadd.f32 %v141, %v130
    %v143 = vadd.f32 %v142, %v131
    %v144 = vadd.f32 %v143, %v132
    %v145 = vadd.f32 %v144, %v133
    %v146 = vadd.f32 %v145, %v134
    %v147 = vadd.f32 %v146, %v135
    %v148 = vadd.f32 %v147, %v136
    %v149 = vadd.f32 %v148, %v137
    %v150 = vrot.slane %v149, 4
    %v151 = vadd.f32 %v149, %v150
    %v152 = vrot.slane %v151, 2
    %v153 = vadd.f32 %v151, %v152
    %v154 = vrot.slane %v153, 1
    %v155 = vadd.f32 %v153, %v154
    %v156 = vmul.f32 %v155, 0.010204081
    %v157 = vmul.f32 %v124, %v124
    %v158 = vsub.f32 %v156, %v157
    %v159 = vsub.f32 %v68, %v124
    %v160 = vsub.f32 %v71, %v124
    %v161 = vsub.f32 %v74, %v124
    %v162 = vsub.f32 %v77, %v124
    %v163 = vsub.f32 %v80, %v124
    %v164 = vsub.f32 %v83, %v124
    %v165 = vsub.f32 %v86, %v124
    %v166 = vsub.f32 %v89, %v124
    %v167 = vsub.f32 %v92, %v124
    %v168 = vsub.f32 %v95, %v124
    %v169 = vsub.f32 %v98, %v124
    %v170 = vsub.f32 %v101, %v124
    %v171 = vsub.f32 %v104, %v124
    %v172 = vadd.f32 %v158, 1e-05
    %v173 = vrsqrt.pop %v172
    %v174 = vmul.f32 %v173, %v172
    %v175 = vmul.f32 %v174, %v173
    %v176 = vmul.f32 0.5, %v175
    %v177 = vsub.f32 1.5, %v176
    %v178 = vmul.f32 %v173, %v177
    %vm179 = vweird.f32 %v172
    %vm180 = vweird.f32 %v173
    %vm181 = vmor %vm179, %vm180
    %v182 = vsel %vm181, %v173, %v178
    %v183 = vmul.f32 %v159, %v182
    %v184 = vmul.f32 %v160, %v182
    %v185 = vmul.f32 %v161, %v182
    %v186 = vmul.f32 %v162, %v182
    %v187 = vmul.f32 %v163, %v182
    %v188 = vmul.f32 %v164, %v182
    %v189 = vmul.f32 %v165, %v182
    %v190 = vmul.f32 %v166, %v182
    %v191 = vmul.f32 %v167, %v182
    %v192 = vmul.f32 %v168, %v182
    %v193 = vmul.f32 %v169, %v182
    %v194 = vmul.f32 %v170, %v182
    %v195 = vmul.f32 %v171, %v182
    %v196 = vmax.f32 %v183, 0.0
    %v197 = vmax.f32 %v184, 0.0
    %v198 = vmax.f32 %v185, 0.0
    %v199 = vmax.f32 %v186, 0.0
    %v200 = vmax.f32 %v187, 0.0
    %v201 = vmax.f32 %v188, 0.0
    %v202 = vmax.f32 %v189, 0.0
    %v203 = vmax.f32 %v190, 0.0
    %v204 = vmax.f32 %v191, 0.0
    %v205 = vmax.f32 %v192, 0.0
    %v206 = vmax.f32 %v193, 0.0
    %v207 = vmax.f32 %v194, 0.0
    %v208 = vmax.f32 %v195, 0.0
    %v209 = vld [vmem:[%s3] sm:$0x3]
    %v210 = vlaneseq
    %v211 = vand.u32 %v210, 127
    %v212 = vld [vmem:[%s2] sm:$0xff]
    %v213 = vld [vmem:[%s2 + $0x8] sm:$0xff]
    %v214 = vld [vmem:[%s2 + $0x10] sm:$0xff]
    %v215 = vld [vmem:[%s2 + $0x18] sm:$0xff]
    %v216 = vld [vmem:[%s2 + $0x20] sm:$0xff]
    %v217 = vld [vmem:[%s2 + $0x28] sm:$0xff]
    %v218 = vld [vmem:[%s2 + $0x30] sm:$0xff]
    %v219 = vld [vmem:[%s2 + $0x38] sm:$0xff]
    %v220 = vld [vmem:[%s2 + $0x40] sm:$0xff]
    %v221 = vld [vmem:[%s2 + $0x48] sm:$0xff]
    %v222 = vld [vmem:[%s2 + $0x50] sm:$0xff]
    %v223 = vld [vmem:[%s2 + $0x58] sm:$0xff]
    %v224 = vld [vmem:[%s2 + $0x60] sm:$0xff]
    %v225 = vmul.f32 %v196, %v212
    %v226 = vmul.f32 %v197, %v213
    %v227 = vmul.f32 %v198, %v214
    %v228 = vmul.f32 %v199, %v215
    %v229 = vmul.f32 %v200, %v216
    %v230 = vmul.f32 %v201, %v217
    %v231 = vmul.f32 %v202, %v218
    %v232 = vmul.f32 %v203, %v219
    %v233 = vmul.f32 %v204, %v220
    %v234 = vmul.f32 %v205, %v221
    %v235 = vmul.f32 %v206, %v222
    %v236 = vmul.f32 %v207, %v223
    %v237 = vmul.f32 %v208, %v224
    %vm238 = vcmask 850944
    %v240 = vsel %vm238, %v209, 0
    %242 = vmatpush.msra.mxu0 0.0
    %243 = vmatpush.msra.mxu0 0.0
    %244 = vmatpush.msra.mxu0 0.0
    %245 = vmatpush.msra.mxu0 %v237
    %246 = vmatpush.msra.mxu0 %v236
    %247 = vmatpush.msra.mxu0 %v235
    %248 = vmatpush.msra.mxu0 %v234
    %249 = vmatpush.msra.mxu0 %v233
    %250 = vmatpush.msra.mxu0 %v232
    %251 = vmatpush.msra.mxu0 %v231
    %252 = vmatpush.msra.mxu0 %v230
    %253 = vmatpush.msra.mxu0 %v229
    %254 = vmatpush.msra.mxu0 %v228
    %255 = vmatpush.msra.mxu0 %v227
    %256 = vmatpush.msra.mxu0 %v226
    %257 = vmatpush.msra.mxu0 %v225
    %258 = vmatmul.f32.gmra.mxu0 %v240
    %v259 = vpop.f32.mrf.mxu0
    %v260 = vadd.f32 0.0, %v259
    %261 = vdwg.mxu0
    %vm262 = vcmask 1041408
    %v263 = vsel %vm262, %v260, 0.0
    %264 = vadd.xlane.f32.xlu0 %v263
    %v265 = vpop.xlane.xlu0 %264
    %vm266 = vcmp.eq.s32.totalorder %v211, 0
    %v267 = vsel %vm266, 1, 0
    %v268 = vcvt.s32.f32 %v267
    %v269 = vmul.f32 %v265, %v268
    %v270 = vadd.f32 %v269, 0.0
    %s271 = scalar_lea.vmem %s2, 104
    %v272 = vld [vmem:[%s271] sm:$0xff]
    %v273 = vld [vmem:[%s271 + $0x8] sm:$0xff]
    %v274 = vld [vmem:[%s271 + $0x10] sm:$0xff]
    %v275 = vld [vmem:[%s271 + $0x18] sm:$0xff]
    %v276 = vld [vmem:[%s271 + $0x20] sm:$0xff]
    %v277 = vld [vmem:[%s271 + $0x28] sm:$0xff]
    %v278 = vld [vmem:[%s271 + $0x30] sm:$0xff]
    %v279 = vld [vmem:[%s271 + $0x38] sm:$0xff]
    %v280 = vld [vmem:[%s271 + $0x40] sm:$0xff]
    %v281 = vld [vmem:[%s271 + $0x48] sm:$0xff]
    %v282 = vld [vmem:[%s271 + $0x50] sm:$0xff]
    %v283 = vld [vmem:[%s271 + $0x58] sm:$0xff]
    %v284 = vld [vmem:[%s271 + $0x60] sm:$0xff]
    %v285 = vmul.f32 %v196, %v272
    %v286 = vmul.f32 %v197, %v273
    %v287 = vmul.f32 %v198, %v274
    %v288 = vmul.f32 %v199, %v275
    %v289 = vmul.f32 %v200, %v276
    %v290 = vmul.f32 %v201, %v277
    %v291 = vmul.f32 %v202, %v278
    %v292 = vmul.f32 %v203, %v279
    %v293 = vmul.f32 %v204, %v280
    %v294 = vmul.f32 %v205, %v281
    %v295 = vmul.f32 %v206, %v282
    %v296 = vmul.f32 %v207, %v283
    %v297 = vmul.f32 %v208, %v284
    %298 = vmatpush.msra.mxu0 0.0
    %299 = vmatpush.msra.mxu0 0.0
    %300 = vmatpush.msra.mxu0 0.0
    %301 = vmatpush.msra.mxu0 %v297
    %302 = vmatpush.msra.mxu0 %v296
    %303 = vmatpush.msra.mxu0 %v295
    %304 = vmatpush.msra.mxu0 %v294
    %305 = vmatpush.msra.mxu0 %v293
    %306 = vmatpush.msra.mxu0 %v292
    %307 = vmatpush.msra.mxu0 %v291
    %308 = vmatpush.msra.mxu0 %v290
    %309 = vmatpush.msra.mxu0 %v289
    %310 = vmatpush.msra.mxu0 %v288
    %311 = vmatpush.msra.mxu0 %v287
    %312 = vmatpush.msra.mxu0 %v286
    %313 = vmatpush.msra.mxu0 %v285
    %314 = vmatmul.f32.gmra.mxu0 %v240
    %v315 = vpop.f32.mrf.mxu0
    %v316 = vadd.f32 0.0, %v315
    %317 = vdwg.mxu0
    %v318 = vsel %vm262, %v316, 0.0
    %319 = vadd.xlane.f32.xlu0 %v318
    %v320 = vpop.xlane.xlu0 %319
    %vm321 = vcmp.eq.s32.totalorder %v211, 1
    %v322 = vsel %vm321, 1, 0
    %v323 = vcvt.s32.f32 %v322
    %v324 = vmul.f32 %v320, %v323
    %v325 = vadd.f32 %v270, %v324
    %s326 = scalar_lea.vmem %s2, 208
    %v327 = vld [vmem:[%s326] sm:$0xff]
    %v328 = vld [vmem:[%s326 + $0x8] sm:$0xff]
    %v329 = vld [vmem:[%s326 + $0x10] sm:$0xff]
    %v330 = vld [vmem:[%s326 + $0x18] sm:$0xff]
    %v331 = vld [vmem:[%s326 + $0x20] sm:$0xff]
    %v332 = vld [vmem:[%s326 + $0x28] sm:$0xff]
    %v333 = vld [vmem:[%s326 + $0x30] sm:$0xff]
    %v334 = vld [vmem:[%s326 + $0x38] sm:$0xff]
    %v335 = vld [vmem:[%s326 + $0x40] sm:$0xff]
    %v336 = vld [vmem:[%s326 + $0x48] sm:$0xff]
    %v337 = vld [vmem:[%s326 + $0x50] sm:$0xff]
    %v338 = vld [vmem:[%s326 + $0x58] sm:$0xff]
    %v339 = vld [vmem:[%s326 + $0x60] sm:$0xff]
    %v340 = vmul.f32 %v196, %v327
    %v341 = vmul.f32 %v197, %v328
    %v342 = vmul.f32 %v198, %v329
    %v343 = vmul.f32 %v199, %v330
    %v344 = vmul.f32 %v200, %v331
    %v345 = vmul.f32 %v201, %v332
    %v346 = vmul.f32 %v202, %v333
    %v347 = vmul.f32 %v203, %v334
    %v348 = vmul.f32 %v204, %v335
    %v349 = vmul.f32 %v205, %v336
    %v350 = vmul.f32 %v206, %v337
    %v351 = vmul.f32 %v207, %v338
    %v352 = vmul.f32 %v208, %v339
    %353 = vmatpush.msra.mxu0 0.0
    %354 = vmatpush.msra.mxu0 0.0
    %355 = vmatpush.msra.mxu0 0.0
    %356 = vmatpush.msra.mxu0 %v352
    %357 = vmatpush.msra.mxu0 %v351
    %358 = vmatpush.msra.mxu0 %v350
    %359 = vmatpush.msra.mxu0 %v349
    %360 = vmatpush.msra.mxu0 %v348
    %361 = vmatpush.msra.mxu0 %v347
    %362 = vmatpush.msra.mxu0 %v346
    %363 = vmatpush.msra.mxu0 %v345
    %364 = vmatpush.msra.mxu0 %v344
    %365 = vmatpush.msra.mxu0 %v343
    %366 = vmatpush.msra.mxu0 %v342
    %367 = vmatpush.msra.mxu0 %v341
    %368 = vmatpush.msra.mxu0 %v340
    %369 = vmatmul.f32.gmra.mxu0 %v240
    %v370 = vpop.f32.mrf.mxu0
    %v371 = vadd.f32 0.0, %v370
    %372 = vdwg.mxu0
    %v373 = vsel %vm262, %v371, 0.0
    %374 = vadd.xlane.f32.xlu0 %v373
    %v375 = vpop.xlane.xlu0 %374
    %vm376 = vcmp.eq.s32.totalorder %v211, 2
    %v377 = vsel %vm376, 1, 0
    %v378 = vcvt.s32.f32 %v377
    %v379 = vmul.f32 %v375, %v378
    %v380 = vadd.f32 %v325, %v379
    %s381 = scalar_lea.vmem %s2, 312
    %v382 = vld [vmem:[%s381] sm:$0xff]
    %v383 = vld [vmem:[%s381 + $0x8] sm:$0xff]
    %v384 = vld [vmem:[%s381 + $0x10] sm:$0xff]
    %v385 = vld [vmem:[%s381 + $0x18] sm:$0xff]
    %v386 = vld [vmem:[%s381 + $0x20] sm:$0xff]
    %v387 = vld [vmem:[%s381 + $0x28] sm:$0xff]
    %v388 = vld [vmem:[%s381 + $0x30] sm:$0xff]
    %v389 = vld [vmem:[%s381 + $0x38] sm:$0xff]
    %v390 = vld [vmem:[%s381 + $0x40] sm:$0xff]
    %v391 = vld [vmem:[%s381 + $0x48] sm:$0xff]
    %v392 = vld [vmem:[%s381 + $0x50] sm:$0xff]
    %v393 = vld [vmem:[%s381 + $0x58] sm:$0xff]
    %v394 = vld [vmem:[%s381 + $0x60] sm:$0xff]
    %v395 = vmul.f32 %v196, %v382
    %v396 = vmul.f32 %v197, %v383
    %v397 = vmul.f32 %v198, %v384
    %v398 = vmul.f32 %v199, %v385
    %v399 = vmul.f32 %v200, %v386
    %v400 = vmul.f32 %v201, %v387
    %v401 = vmul.f32 %v202, %v388
    %v402 = vmul.f32 %v203, %v389
    %v403 = vmul.f32 %v204, %v390
    %v404 = vmul.f32 %v205, %v391
    %v405 = vmul.f32 %v206, %v392
    %v406 = vmul.f32 %v207, %v393
    %v407 = vmul.f32 %v208, %v394
    %408 = vmatpush.msra.mxu0 0.0
    %409 = vmatpush.msra.mxu0 0.0
    %410 = vmatpush.msra.mxu0 0.0
    %411 = vmatpush.msra.mxu0 %v407
    %412 = vmatpush.msra.mxu0 %v406
    %413 = vmatpush.msra.mxu0 %v405
    %414 = vmatpush.msra.mxu0 %v404
    %415 = vmatpush.msra.mxu0 %v403
    %416 = vmatpush.msra.mxu0 %v402
    %417 = vmatpush.msra.mxu0 %v401
    %418 = vmatpush.msra.mxu0 %v400
    %419 = vmatpush.msra.mxu0 %v399
    %420 = vmatpush.msra.mxu0 %v398
    %421 = vmatpush.msra.mxu0 %v397
    %422 = vmatpush.msra.mxu0 %v396
    %423 = vmatpush.msra.mxu0 %v395
    %424 = vmatmul.f32.gmra.mxu0 %v240
    %v425 = vpop.f32.mrf.mxu0
    %v426 = vadd.f32 0.0, %v425
    %427 = vdwg.mxu0
    %v428 = vsel %vm262, %v426, 0.0
    %429 = vadd.xlane.f32.xlu0 %v428
    %v430 = vpop.xlane.xlu0 %429
    %vm431 = vcmp.eq.s32.totalorder %v211, 3
    %v432 = vsel %vm431, 1, 0
    %v433 = vcvt.s32.f32 %v432
    %v434 = vmul.f32 %v430, %v433
    %v435 = vadd.f32 %v380, %v434
    %s436 = scalar_lea.vmem %s2, 416
    %v437 = vld [vmem:[%s436] sm:$0xff]
    %v438 = vld [vmem:[%s436 + $0x8] sm:$0xff]
    %v439 = vld [vmem:[%s436 + $0x10] sm:$0xff]
    %v440 = vld [vmem:[%s436 + $0x18] sm:$0xff]
    %v441 = vld [vmem:[%s436 + $0x20] sm:$0xff]
    %v442 = vld [vmem:[%s436 + $0x28] sm:$0xff]
    %v443 = vld [vmem:[%s436 + $0x30] sm:$0xff]
    %v444 = vld [vmem:[%s436 + $0x38] sm:$0xff]
    %v445 = vld [vmem:[%s436 + $0x40] sm:$0xff]
    %v446 = vld [vmem:[%s436 + $0x48] sm:$0xff]
    %v447 = vld [vmem:[%s436 + $0x50] sm:$0xff]
    %v448 = vld [vmem:[%s436 + $0x58] sm:$0xff]
    %v449 = vld [vmem:[%s436 + $0x60] sm:$0xff]
    %v450 = vmul.f32 %v196, %v437
    %v451 = vmul.f32 %v197, %v438
    %v452 = vmul.f32 %v198, %v439
    %v453 = vmul.f32 %v199, %v440
    %v454 = vmul.f32 %v200, %v441
    %v455 = vmul.f32 %v201, %v442
    %v456 = vmul.f32 %v202, %v443
    %v457 = vmul.f32 %v203, %v444
    %v458 = vmul.f32 %v204, %v445
    %v459 = vmul.f32 %v205, %v446
    %v460 = vmul.f32 %v206, %v447
    %v461 = vmul.f32 %v207, %v448
    %v462 = vmul.f32 %v208, %v449
    %463 = vmatpush.msra.mxu0 0.0
    %464 = vmatpush.msra.mxu0 0.0
    %465 = vmatpush.msra.mxu0 0.0
    %466 = vmatpush.msra.mxu0 %v462
    %467 = vmatpush.msra.mxu0 %v461
    %468 = vmatpush.msra.mxu0 %v460
    %469 = vmatpush.msra.mxu0 %v459
    %470 = vmatpush.msra.mxu0 %v458
    %471 = vmatpush.msra.mxu0 %v457
    %472 = vmatpush.msra.mxu0 %v456
    %473 = vmatpush.msra.mxu0 %v455
    %474 = vmatpush.msra.mxu0 %v454
    %475 = vmatpush.msra.mxu0 %v453
    %476 = vmatpush.msra.mxu0 %v452
    %477 = vmatpush.msra.mxu0 %v451
    %478 = vmatpush.msra.mxu0 %v450
    %479 = vmatmul.f32.gmra.mxu0 %v240
    %v480 = vpop.f32.mrf.mxu0
    %v481 = vadd.f32 0.0, %v480
    %482 = vdwg.mxu0
    %v483 = vsel %vm262, %v481, 0.0
    %484 = vadd.xlane.f32.xlu0 %v483
    %v485 = vpop.xlane.xlu0 %484
    %vm486 = vcmp.eq.s32.totalorder %v211, 4
    %v487 = vsel %vm486, 1, 0
    %v488 = vcvt.s32.f32 %v487
    %v489 = vmul.f32 %v485, %v488
    %v490 = vadd.f32 %v435, %v489
    %s491 = scalar_lea.vmem %s2, 520
    %v492 = vld [vmem:[%s491] sm:$0xff]
    %v493 = vld [vmem:[%s491 + $0x8] sm:$0xff]
    %v494 = vld [vmem:[%s491 + $0x10] sm:$0xff]
    %v495 = vld [vmem:[%s491 + $0x18] sm:$0xff]
    %v496 = vld [vmem:[%s491 + $0x20] sm:$0xff]
    %v497 = vld [vmem:[%s491 + $0x28] sm:$0xff]
    %v498 = vld [vmem:[%s491 + $0x30] sm:$0xff]
    %v499 = vld [vmem:[%s491 + $0x38] sm:$0xff]
    %v500 = vld [vmem:[%s491 + $0x40] sm:$0xff]
    %v501 = vld [vmem:[%s491 + $0x48] sm:$0xff]
    %v502 = vld [vmem:[%s491 + $0x50] sm:$0xff]
    %v503 = vld [vmem:[%s491 + $0x58] sm:$0xff]
    %v504 = vld [vmem:[%s491 + $0x60] sm:$0xff]
    %v505 = vmul.f32 %v196, %v492
    %v506 = vmul.f32 %v197, %v493
    %v507 = vmul.f32 %v198, %v494
    %v508 = vmul.f32 %v199, %v495
    %v509 = vmul.f32 %v200, %v496
    %v510 = vmul.f32 %v201, %v497
    %v511 = vmul.f32 %v202, %v498
    %v512 = vmul.f32 %v203, %v499
    %v513 = vmul.f32 %v204, %v500
    %v514 = vmul.f32 %v205, %v501
    %v515 = vmul.f32 %v206, %v502
    %v516 = vmul.f32 %v207, %v503
    %v517 = vmul.f32 %v208, %v504
    %518 = vmatpush.msra.mxu0 0.0
    %519 = vmatpush.msra.mxu0 0.0
    %520 = vmatpush.msra.mxu0 0.0
    %521 = vmatpush.msra.mxu0 %v517
    %522 = vmatpush.msra.mxu0 %v516
    %523 = vmatpush.msra.mxu0 %v515
    %524 = vmatpush.msra.mxu0 %v514
    %525 = vmatpush.msra.mxu0 %v513
    %526 = vmatpush.msra.mxu0 %v512
    %527 = vmatpush.msra.mxu0 %v511
    %528 = vmatpush.msra.mxu0 %v510
    %529 = vmatpush.msra.mxu0 %v509
    %530 = vmatpush.msra.mxu0 %v508
    %531 = vmatpush.msra.mxu0 %v507
    %532 = vmatpush.msra.mxu0 %v506
    %533 = vmatpush.msra.mxu0 %v505
    %534 = vmatmul.f32.gmra.mxu0 %v240
    %v535 = vpop.f32.mrf.mxu0
    %v536 = vadd.f32 0.0, %v535
    %537 = vdwg.mxu0
    %v538 = vsel %vm262, %v536, 0.0
    %539 = vadd.xlane.f32.xlu0 %v538
    %v540 = vpop.xlane.xlu0 %539
    %vm541 = vcmp.eq.s32.totalorder %v211, 5
    %v542 = vsel %vm541, 1, 0
    %v543 = vcvt.s32.f32 %v542
    %v544 = vmul.f32 %v540, %v543
    %v545 = vadd.f32 %v490, %v544
    %v546 = vld [vmem:[%s4] sm:$0x1]
    %v548 = vperm.slane %v546, 0
    %v550 = vadd.f32 %v545, %v548
    %vm551 = vcmask 41984
    %552 = vst.msk [vmem:[#allocation2] sm:$0x3] %vm551, %v550
    // Predicated region
    $region22: #{pose_layer.1} parent=1 // pred_check
      _
    $region23: #{pose_layer.1} parent=1 // pred_check_branch
      %554 = sbr.rel (0) target = $region25
    $region24: #{pose_layer.1} parent=1 // pred_region
      %556 = vsyncadd [#allocation3], 0
      %s558 = sshll.u32 [#allocation2], 4
      %s559 = int_to_ptr.vmem [resolvable:$true] %s558
      %s560 = sshll.u32 %s5, 4
      %s561 = int_to_ptr.hbm [resolvable:$true] %s560
      %563 = dma.vmem_to_hbm [thread:$0]  %s559, 32, %s561, [#allocation3]
    $region25: #{pose_layer.1} parent=1 // pred_fallthru
      _
    // Predicated region
    $region26: #{pose_layer.1} parent=1 // pred_check
      _
    $region27: #{pose_layer.1} parent=1 // pred_check_branch
      %565 = sbr.rel (0) target = $region29
    $region28: #{pose_layer.1} parent=1 // pred_region
      %567 = dma.done [#allocation3], 32
    $region29: #{pose_layer.1} parent=1 // pred_fallthru
      _
    %568 = vsyncpa [#allocation3], 1

</llo_original>
